<compile_context>
chip_gen: v6e
topology: v6e:2x2x1
jax: 0.10.0
libtpu: 0.0.40
codegen_flags: <defaults>
</compile_context>

<pallas_src>
import jax
import jax.numpy as jnp
from jax.experimental import pallas as pl
from jax.experimental.pallas import tpu as pltpu


# ----------------------------- helpers ---------------------------------
def _round_up(x, m):
    return ((x + m - 1) // m) * m


def _vmem_capacity_bytes():
    """Physical VMEM per core; conservative fallback (v7x) if the query fails."""
    try:
        info = pltpu.get_tpu_info()
        cap = getattr(info, "vmem_capacity_bytes", None)
        if cap:
            return int(cap)
    except Exception:
        pass
    return 64 * 1024 * 1024


def _pick_tile(dim, align, target):
    """Largest multiple of `align` <= target that exactly tiles
    round_up(dim, align) (i.e. zero extra padding); fall back to `target`
    (accepting padding) only if the divisors are pathologically small."""
    d = _round_up(dim, align)
    target = max(align, (target // align) * align)
    if d <= target:
        return d
    cand = target
    while cand >= align:
        if d % cand == 0:
            break
        cand -= align
    if cand >= max(align, target // 4):
        return cand
    return target


def _choose_tiles(M, N, K, in_b, out_b, acc_in_out, budget,
                  tm_max, tn_max, tk_max):
    tm = _pick_tile(M, 16, tm_max)      # bf16 native sublane packing is (16, 128)
    tn = _pick_tile(N, 128, tn_max)     # lane-dense (unmasked) output stores
    while True:
        out_buf = 2 * tm * tn * out_b                      # double-buffered output
        # (a) Full-K panels: single reduction step, no accumulator, no K padding.
        full_k = out_buf + 2 * (tm * K + K * tn) * in_b
        if (tk_max is None or K <= tk_max) and full_k <= budget:
            return tm, tn, K
        # (b) Split K.
        acc = 0 if acc_in_out else tm * tn * 4             # fp32 scratch accumulator
        avail = budget - out_buf - acc
        tk_fit = (avail // (2 * in_b * (tm + tn))) // 128 * 128
        if tk_max is not None:
            tk_fit = min(tk_fit, (tk_max // 128) * 128)
        if tk_fit >= 128:
            return tm, tn, _pick_tile(K, 128, tk_fit)
        # (c) Output tile too large for VMEM: shrink and retry.
        if tn >= tm and tn > 128:
            tn = max(128, (tn // 2) // 128 * 128)
        elif tm > 16:
            tm = max(16, (tm // 2) // 16 * 16)
        else:
            return tm, tn, 128


# ----------------------------- kernels ----------------------------------
def _linear_kernel_single(x_ref, wt_ref, o_ref):
    # Whole K panel in one step: straight MXU matmul, fp32 accumulate, cast once.
    o_ref[...] = jnp.dot(x_ref[...], wt_ref[...],
                         preferred_element_type=jnp.float32).astype(o_ref.dtype)


def _linear_kernel_accum_out(x_ref, wt_ref, o_ref):
    # fp32 output resident in VMEM across the K axis: accumulate in place.
    @pl.when(pl.program_id(2) == 0)
    def _init():
        o_ref[...] = jnp.zeros_like(o_ref)

    o_ref[...] += jnp.dot(x_ref[...], wt_ref[...],
                          preferred_element_type=jnp.float32)


def _linear_kernel_scratch(x_ref, wt_ref, o_ref, acc_ref):
    # Non-fp32 output with K split: fp32 scratch accumulator, cast at the end.
    @pl.when(pl.program_id(2) == 0)
    def _init():
        acc_ref[...] = jnp.zeros_like(acc_ref)

    acc_ref[...] += jnp.dot(x_ref[...], wt_ref[...],
                            preferred_element_type=jnp.float32)

    @pl.when(pl.program_id(2) == pl.num_programs(2) - 1)
    def _finalize():
        o_ref[...] = acc_ref[...].astype(o_ref.dtype)


# ----------------------------- wrapper ----------------------------------
def prepare_weight(w, compute_dtype=jnp.bfloat16):
    """One-time (out,in) -> (in,out) transpose + cast. Do this OUTSIDE the hot
    path (e.g. at parameter-load time) and pass the result via linear(w_t=...)
    to avoid a full HBM read+write of W on every call."""
    return jnp.swapaxes(w, 0, 1).astype(compute_dtype)


def linear(x, w=None, *, w_t=None, compute_dtype=jnp.bfloat16,
           tm_max=1024, tn_max=1024, tk_max=None):
    """y = x @ W.T  (PyTorch Linear forward, no bias).

    x   : (..., in_features)
    w   : (out_features, in_features)   PyTorch layout (transposed per call), or
    w_t : (in_features, out_features)   pre-transposed weight from prepare_weight().
    """
    *lead, K = x.shape
    if w_t is None:
        assert w is not None, "pass either w or w_t"
        w_t = prepare_weight(w, compute_dtype)
    else:
        w_t = w_t.astype(compute_dtype)
    Kw, N = w_t.shape
    assert K == Kw, (K, Kw)

    out_dtype = x.dtype
    x2 = x.reshape(-1, K).astype(compute_dtype)
    M = x2.shape[0]

    in_b = jnp.dtype(compute_dtype).itemsize
    out_b = jnp.dtype(out_dtype).itemsize
    acc_in_out = jnp.dtype(out_dtype) == jnp.dtype(jnp.float32)

    vmem_cap = _vmem_capacity_bytes()
    budget = int(vmem_cap * 0.70)          # headroom for compiler internal scratch

    if tk_max is not None:
        tk_max = max(128, int(tk_max))
    tm, tn, tk = _choose_tiles(M, N, K, in_b, out_b, acc_in_out, budget,
                               tm_max, tn_max, tk_max)

    Mp = _round_up(M, tm)
    Np = _round_up(N, tn)
    Kp = K if tk == K else _round_up(K, tk)
    k_steps = Kp // tk

    # Zero-pad only when strictly necessary (padding is exact for the matmul).
    if (Mp, Kp) != (M, K):
        x2 = jnp.pad(x2, ((0, Mp - M), (0, Kp - K)))
    if (Kp, Np) != (K, N):
        w_t = jnp.pad(w_t, ((0, Kp - K), (0, Np - N)))

    gm, gn = Mp // tm, Np // tn

    cost = pl.CostEstimate(
        flops=2 * M * N * K,
        transcendentals=0,
        bytes_accessed=int((gn * Mp * Kp + gm * Kp * Np) * in_b + Mp * Np * out_b))

    acc_bytes = 0
    if k_steps == 1:
        kernel = _linear_kernel_single
        grid = (gm, gn)
        in_specs = [pl.BlockSpec((tm, Kp), lambda i, j: (i, 0)),
                    pl.BlockSpec((Kp, tn), lambda i, j: (0, j))]
        out_spec = pl.BlockSpec((tm, tn), lambda i, j: (i, j))
        scratch = []
        dims = ("parallel", "parallel")
    else:
        grid = (gm, gn, k_steps)
        in_specs = [pl.BlockSpec((tm, tk), lambda i, j, k: (i, k)),
                    pl.BlockSpec((tk, tn), lambda i, j, k: (k, j))]
        out_spec = pl.BlockSpec((tm, tn), lambda i, j, k: (i, j))
        dims = ("parallel", "parallel", "arbitrary")
        if acc_in_out:
            kernel = _linear_kernel_accum_out
            scratch = []
        else:
            kernel = _linear_kernel_scratch
            scratch = [pltpu.VMEM((tm, tn), jnp.float32)]
            acc_bytes = tm * tn * 4

    pipeline_bytes = (2 * (tm * tk + tk * tn) * in_b
                      + 2 * tm * tn * out_b + acc_bytes)
    # Never hand the compiler the entire physical VMEM (v7x has only 64 MiB/TC).
    vmem_limit = min(int(vmem_cap * 0.80),
                     max(32 * 1024 * 1024, pipeline_bytes + (8 << 20)))

    out = pl.pallas_call(
        kernel,
        out_shape=jax.ShapeDtypeStruct((Mp, Np), out_dtype),
        grid_spec=pltpu.PrefetchScalarGridSpec(
            num_scalar_prefetch=0,
            grid=grid,
            in_specs=in_specs,
            out_specs=out_spec,
            scratch_shapes=scratch,
        ),
        compiler_params=pltpu.CompilerParams(
            dimension_semantics=dims,
            vmem_limit_bytes=int(vmem_limit)),
        cost_estimate=cost,
    )(x2, w_t)

    if (Mp, Np) != (M, N):
        out = out[:M, :N]
    return out.reshape(*lead, N)


# ---------------- references / init (for verification) ----------------
def _reference_fp32(x, w):
    return jnp.einsum("...i,ji->...j", x.astype(jnp.float32),
                      w.astype(jnp.float32),
                      precision=jax.lax.Precision.HIGHEST)


def _reference_bf16_path(x, w):
    # Same compute path as the kernel: bf16 operands, fp32 accumulation.
    xb = x.astype(jnp.bfloat16).astype(jnp.float32)
    wb = w.astype(jnp.bfloat16).astype(jnp.float32)
    return jnp.einsum("...i,ji->...j", xb, wb,
                      precision=jax.lax.Precision.HIGHEST)


def init_weight(key, out_features, in_features):
    std = (2.0 / (in_features + out_features)) ** 0.5
    w = jax.random.truncated_normal(key, -3.0, 3.0,
                                    (out_features, in_features),
                                    dtype=jnp.float32) * std
    return w


if __name__ == "__main__":
    key = jax.random.PRNGKey(0)
    kx, kw, kx2, kw2, kx3, kw3 = jax.random.split(key, 6)

    # 1) Small case consistent with the module: (batch=2, seq=8, in=32) -> out=64.
    #    Exercises the collapsed-K (single-step, no accumulator) path.
    B, S, IN, OUT = 2, 8, 32, 64
    x = jax.random.normal(kx, (B, S, IN), dtype=jnp.float32)
    w = init_weight(kw, OUT, IN)
    y = jax.block_until_ready(linear(x, w))
    assert y.shape == (B, S, OUT)
    assert jnp.allclose(y, _reference_bf16_path(x, w), atol=1e-4, rtol=1e-4), \
        "mismatch vs bf16-path reference"
    assert jnp.allclose(y, _reference_fp32(x, w), atol=5e-2, rtol=5e-2), \
        "mismatch vs fp32 reference"

    # 2) Multi-tile (M, N) grid + K-split reduction, fp32 output accumulated
    #    directly in the resident output tile; pre-transposed (hoisted) weight.
    x2 = jax.random.normal(kx2, (3, 112, 384), dtype=jnp.float32)   # M = 336
    w2 = init_weight(kw2, 320, 384)
    w2t = prepare_weight(w2)
    y2 = jax.block_until_ready(
        linear(x2, w_t=w2t, tm_max=128, tn_max=128, tk_max=128))
    assert y2.shape == (3, 112, 320)
    assert jnp.allclose(y2, _reference_bf16_path(x2, w2), atol=1e-3, rtol=1e-3), \
        "mismatch (multi-tile fp32 accumulate-in-output)"

    # 3) bf16 output with K split: exercises the fp32 scratch-accumulator path.
    x3 = jax.random.normal(kx3, (4, 64, 256), dtype=jnp.float32).astype(jnp.bfloat16)
    w3 = init_weight(kw3, 192, 256).astype(jnp.bfloat16)
    y3 = jax.block_until_ready(
        linear(x3, w3, tm_max=128, tn_max=128, tk_max=128))
    assert y3.shape == (4, 64, 192)
    ref3 = _reference_bf16_path(x3, w3)
    assert jnp.allclose(y3.astype(jnp.float32), ref3, atol=2e-2, rtol=2e-2), \
        "mismatch (K-split bf16 output)"

    print("KERNEL_OK")
</pallas_src>

<mosaic_0001>
module attributes {stable_mosaic.version = 11 : i64} {
  func.func @_linear_kernel_single(%arg0: i32, %arg1: i32, %arg2: memref<16x32xbf16, #tpu.memory_space<vmem>>, %arg3: memref<32x128xbf16, #tpu.memory_space<vmem>>, %arg4: memref<16x128xf32, #tpu.memory_space<vmem>>) attributes {dimension_semantics = [#tpu.dimension_semantics<parallel>, #tpu.dimension_semantics<parallel>], iteration_bounds = array<i64: 1, 1>, scalar_prefetch = 0 : i64, scratch_operands = 0 : i64, tpu.core_type = #tpu.core_type<tc>, window_params = [{transform_indices = @transform_0, window_bounds = array<i64: 16, 32>}, {transform_indices = @transform_1, window_bounds = array<i64: 32, 128>}, {transform_indices = @transform_2, window_bounds = array<i64: 16, 128>}]} {
    %c0 = arith.constant 0 : index
    %c0_0 = arith.constant 0 : index
    %0 = vector.load %arg2[%c0, %c0_0] : memref<16x32xbf16, #tpu.memory_space<vmem>>, vector<16x32xbf16>
    %c0_1 = arith.constant 0 : index
    %c0_2 = arith.constant 0 : index
    %1 = vector.load %arg3[%c0_1, %c0_2] : memref<32x128xbf16, #tpu.memory_space<vmem>>, vector<32x128xbf16>
    %cst = arith.constant dense<0.000000e+00> : vector<16x128xf32>
    %2 = tpu.matmul %0, %1, %cst {dimension_numbers = #tpu.dot_dimension_numbers<[1], [0], [0], [1], [0, 0, 1, 1], [], []>} : vector<16x32xbf16>, vector<32x128xbf16>, vector<16x128xf32> -> vector<16x128xf32>
    %c0_3 = arith.constant 0 : index
    %c0_4 = arith.constant 0 : index
    %3 = vector.load %arg4[%c0_3, %c0_4] : memref<16x128xf32, #tpu.memory_space<vmem>>, vector<16x128xf32>
    tpu.vector_store %arg4[%c0_3, %c0_4], %2 {strides = array<i32>} : memref<16x128xf32, #tpu.memory_space<vmem>>, vector<16x128xf32>,
    return
  }
  func.func @transform_0(%arg0: i32, %arg1: i32) -> (i32, i32) {
    %c0_i32 = arith.constant 0 : i32
    %c0_i32_0 = arith.constant 0 : i32
    return %arg0, %c0_i32 : i32, i32
  }
  func.func @transform_1(%arg0: i32, %arg1: i32) -> (i32, i32) {
    %c0_i32 = arith.constant 0 : i32
    %c0_i32_0 = arith.constant 0 : i32
    return %c0_i32, %arg1 : i32, i32
  }
  func.func @transform_2(%arg0: i32, %arg1: i32) -> (i32, i32) {
    %c0_i32 = arith.constant 0 : i32
    return %arg0, %arg1 : i32, i32
  }
}

</mosaic_0001>

<llo_original>
// kernel: tpu_custom_call.1
$region0: #{tpu_custom_call.1}
  #allocation0 [shape = 'u32[]', space=smem, size = 0x4, offset = 0x4, fixed_abs, tag = 'smem constant byte address 0x4 - core index']
  #allocation1 [shape = 'u32[144,128]{1,0:T(1,128)}', space=vmem, size = 0x12000, scoped, tag = 'internal scratch']
  %s0 = inlined_call_operand.hbm [shape: bf16[16,32], index: 0, kind: input, shape index: {}]
  %s1 = inlined_call_operand.hbm [shape: bf16[32,128], index: 1, kind: input, shape index: {}]
  %s2 = inlined_call_operand.hbm [shape: f32[16,128], index: 2, kind: output, shape index: {}]
  %s3 = sld [smem:[#allocation0]]
  $region26: #{tpu_custom_call.1} parent=0
    _
  %s5 = ssub.s32 1, %s3
  %s6 = scalar_select 0, %s5, %s3
  $region1: #{tpu_custom_call.1} parent=0
    #allocation2 [shape = 'u8[4096]{0}', space=vmem, size = 0x1000, scoped, tag = 'input window, operand 0, single buffered']
    #allocation3 [shape = 's32[1]{0}', space=sflag, size = 0x4, scoped, tag = 'scoped memory for tpu_custom_call.1']
    #allocation4 [shape = 's32[1]{0}', space=sflag, size = 0x4, scoped, tag = 'scoped memory for tpu_custom_call.1']
    #allocation5 [shape = 'u8[8192]{0}', space=vmem, size = 0x2000, scoped, tag = 'input window, operand 1, single buffered']
    #allocation6 [shape = 's32[1]{0}', space=sflag, size = 0x4, scoped, tag = 'scoped memory for tpu_custom_call.1']
    #allocation7 [shape = 'u8[8192]{0}', space=vmem, size = 0x2000, scoped, tag = 'output window, operand 0, single buffered']
    %7 = vsyncpa [#allocation3], 0
    %8 = vsyncpa [#allocation6], 0
    %9 = vsyncpa [#allocation4], 0
    // Predicated region
    $region2: #{tpu_custom_call.1} parent=1 // pred_check
      _
    $region3: #{tpu_custom_call.1} parent=1 // pred_check_branch
      %11 = sbr.rel (0) target = $region5
    $region4: #{tpu_custom_call.1} parent=1 // pred_region
      %s13 = ssub.s32 128, 128
      %14 = vsyncadd [#allocation3], %s13
      %s15 = sshll.u32 [#allocation2], 4
      %s16 = int_to_ptr.vmem [resolvable:$true] %s15
      %21 = dma.hbm_to_vmem [thread:$0]  %s0, 128, %s16, [#allocation3], 64, 64, 4
    $region5: #{tpu_custom_call.1} parent=1 // pred_fallthru
      _
    // Predicated region
    $region6: #{tpu_custom_call.1} parent=1 // pred_check
      _
    $region7: #{tpu_custom_call.1} parent=1 // pred_check_branch
      %23 = sbr.rel (0) target = $region9
    $region8: #{tpu_custom_call.1} parent=1 // pred_region
      %s25 = ssub.s32 256, 256
      %26 = vsyncadd [#allocation6], %s25
      %s27 = sshll.u32 [#allocation5], 4
      %s28 = int_to_ptr.vmem [resolvable:$true] %s27
      %33 = dma.hbm_to_vmem [thread:$0]  %s1, 256, %s28, [#allocation6], 64, 64, 4
    $region9: #{tpu_custom_call.1} parent=1 // pred_fallthru
      _
    // Predicated region
    $region10: #{tpu_custom_call.1} parent=1 // pred_check
      _
    $region11: #{tpu_custom_call.1} parent=1 // pred_check_branch
      %35 = sbr.rel (0) target = $region13
    $region12: #{tpu_custom_call.1} parent=1 // pred_region
      %36 = dma.done [#allocation3], 128
    $region13: #{tpu_custom_call.1} parent=1 // pred_fallthru
      _
    // Predicated region
    $region14: #{tpu_custom_call.1} parent=1 // pred_check
      _
    $region15: #{tpu_custom_call.1} parent=1 // pred_check_branch
      %38 = sbr.rel (0) target = $region17
    $region16: #{tpu_custom_call.1} parent=1 // pred_region
      %39 = dma.done [#allocation6], 256
    $region17: #{tpu_custom_call.1} parent=1 // pred_fallthru
      _
    %v41 = vld [vmem:[#allocation2] sm:$0xf]
    %v42 = vld [vmem:[#allocation2 + $0x4] sm:$0xf]
    %v43 = vld [vmem:[#allocation5] sm:$0xf]
    %v44 = vld [vmem:[#allocation5 + $0x4] sm:$0xf]
    %v45 = vld [vmem:[#allocation5 + $0x8] sm:$0xf]
    %v46 = vld [vmem:[#allocation5 + $0xc] sm:$0xf]
    %v49 = vunpack.c.l.b16 %v41
    %v50 = vunpack.c.l.b16 %v42
    %v51 = vpack.c.b16 %v50, %v49
    %v56 = vunpack.c.l.b16 %v43
    %v57 = vunpack.c.l.b16 %v44
    %v58 = vunpack.c.l.b16 %v45
    %v59 = vunpack.c.l.b16 %v46
    %v60 = vpack.c.b16 %v57, %v56
    %v61 = vpack.c.b16 %v59, %v58
    %vm64 = vcmask 261120
    %v66 = vsel %vm64, %v51, 0
    %68 = vmatprep.subr.bf16.mxu0 0
    %69 = vmatpush1.bf16.msra.mxu0 0
    %70 = vmatprep.subr.bf16.mxu0 0
    %71 = vmatpush1.bf16.msra.mxu0 0
    %72 = vmatprep.subr.bf16.mxu0 0
    %73 = vmatpush1.bf16.msra.mxu0 0
    %74 = vmatprep.subr.bf16.mxu0 0
    %75 = vmatpush1.bf16.msra.mxu0 0
    %76 = vmatprep.subr.bf16.mxu0 0
    %77 = vmatpush1.bf16.msra.mxu0 0
    %78 = vmatprep.subr.bf16.mxu0 0
    %79 = vmatpush1.bf16.msra.mxu0 0
    %80 = vmatprep.subr.bf16.mxu0 0
    %81 = vmatpush1.bf16.msra.mxu0 %v61
    %82 = vmatprep.subr.bf16.mxu0 0
    %83 = vmatpush1.bf16.msra.mxu0 %v60
    %84 = vmatprep.subr.bf16.mxu0 0
    %85 = vmatpush2.bf16.msra.mxu0 0
    %86 = vmatprep.subr.bf16.mxu0 0
    %87 = vmatpush2.bf16.msra.mxu0 0
    %88 = vmatprep.subr.bf16.mxu0 0
    %89 = vmatpush2.bf16.msra.mxu0 0
    %90 = vmatprep.subr.bf16.mxu0 0
    %91 = vmatpush2.bf16.msra.mxu0 0
    %92 = vmatprep.subr.bf16.mxu0 0
    %93 = vmatpush2.bf16.msra.mxu0 0
    %94 = vmatprep.subr.bf16.mxu0 0
    %95 = vmatpush2.bf16.msra.mxu0 0
    %96 = vmatprep.subr.bf16.mxu0 0
    %97 = vmatpush2.bf16.msra.mxu0 0
    %98 = vmatprep.subr.bf16.mxu0 0
    %99 = vmatpush2.bf16.msra.mxu0 0
    %100 = vmatprep.mubr.bf16.mxu0 0
    %101 = vmatmul.mubr.bf16.gmra.mxu0 %v66
    %v102 = vpop.f32.mrf.mxu0
    %v103 = vadd.f32 0.0, %v102
    %v104 = vpop.f32.mrf.mxu0
    %v105 = vpop.f32.mrf.mxu0
    %v106 = vadd.f32 0.0, %v105
    %v107 = vpop.f32.mrf.mxu0
    %108 = vdwg.mxu0
    %109 = vst [vmem:[#allocation7] sm:$0xff] %v103
    %110 = vst [vmem:[#allocation7 + $0x8] sm:$0xff] %v106
    // Predicated region
    $region18: #{tpu_custom_call.1} parent=1 // pred_check
      _
    $region19: #{tpu_custom_call.1} parent=1 // pred_check_branch
      %112 = sbr.rel (0) target = $region21
    $region20: #{tpu_custom_call.1} parent=1 // pred_region
      %s114 = ssub.s32 256, 256
      %115 = vsyncadd [#allocation4], %s114
      %s116 = sshll.u32 [#allocation7], 4
      %s117 = int_to_ptr.vmem [resolvable:$true] %s116
      %122 = dma.vmem_to_hbm [thread:$0]  %s117, 256, %s2, [#allocation4], 128, 128, 8
    $region21: #{tpu_custom_call.1} parent=1 // pred_fallthru
      _
    // Predicated region
    $region22: #{tpu_custom_call.1} parent=1 // pred_check
      _
    $region23: #{tpu_custom_call.1} parent=1 // pred_check_branch
      %124 = sbr.rel (0) target = $region25
    $region24: #{tpu_custom_call.1} parent=1 // pred_region
      %125 = dma.done [#allocation4], 256
    $region25: #{tpu_custom_call.1} parent=1 // pred_fallthru
      _
    %126 = vsyncpa [#allocation3], 1
    %127 = vsyncpa [#allocation6], 1
    %128 = vsyncpa [#allocation4], 1

</llo_original>
